<compile_context>
chip_gen: v7x
topology: tpu7x:2x2x1
jax: 0.10.0
libtpu: 0.0.40
codegen_flags: <defaults>
</compile_context>

<pallas_src>
import functools

import jax
import jax.numpy as jnp
from jax.experimental import pallas as pl
from jax.experimental.pallas import tpu as pltpu


def _round_up(a, b):
    return (a + b - 1) // b * b


# Tile caps.  Actual tiles are chosen to divide the minimally padded dims.
# Per-tile VMEM (worst case with 1.5x overshoot, f32 x path, double buffers)
# stays under ~20 MiB -> fits the explicit 48 MiB limit on every generation.
_TM_CAP, _TN_CAP, _TK_CAP = 512, 1024, 512
_VMEM_LIMIT = 48 * 1024 * 1024


def _pick_tile(padded, cap, unit):
    """Largest tile (multiple of `unit`) <= cap that divides `padded`.
    If the whole dim fits within 1.5x the cap, use it as a single tile
    (one slightly larger tile beats splitting + re-streaming)."""
    if padded <= cap + cap // 2:
        return padded
    t = (cap // unit) * unit
    while t >= unit:
        if padded % t == 0:
            return t
        t -= unit
    return unit


# ----------------------------------------------------------------------------
# Pallas kernel: tiled fused Linear (x @ W + b) + tanh-GELU
# ----------------------------------------------------------------------------
def _linear_gelu_kernel(x_ref, w_ref, b_ref, o_ref):
    k = pl.program_id(2)

    @pl.when(k == 0)
    def _():
        # The f32 output block is resident across the K axis -> use it as the
        # accumulator, initialized with the (broadcast) bias.
        o_ref[...] = jnp.broadcast_to(b_ref[...], o_ref.shape)

    # MXU sees bf16 operands, f32 accumulation.  If x arrives as f32 the cast
    # is a VPU op hidden under the MXU-bound loop; if bf16 it is a no-op.
    o_ref[...] += jnp.dot(x_ref[...].astype(jnp.bfloat16), w_ref[...],
                          preferred_element_type=jnp.float32)

    @pl.when(k == pl.num_programs(2) - 1)
    def _():
        # tanh-GELU lowers to the EUP slot (free under an MXU-bound loop).
        o_ref[...] = jax.nn.gelu(o_ref[...], approximate=True)


@functools.partial(jax.jit, static_argnames=("n_out",))
def _linear_gelu(x2d, w_pad, b_pad, *, n_out):
    """x2d: (M, K) f32, w_pad: (Kp, Np) bf16 (pre-padded at init),
    b_pad: (1, Np) f32 -> (M, n_out) f32."""
    M, K = x2d.shape
    Kp, Np = w_pad.shape

    Mp = _round_up(M, 16)                      # 16: bf16 sublane packing
    tm = _pick_tile(Mp, _TM_CAP, 16)
    tk = _pick_tile(Kp, _TK_CAP, 128)
    tn = _pick_tile(Np, _TN_CAP, 128)

    # Pad x only to the minimal aligned shape (zero K-padding contributes 0 to
    # the dot).  Keep x in f32 unless it will be re-streamed across many N
    # tiles, in which case the one-off bf16 pre-cast pays for itself.
    xp = x2d
    if Mp != M or Kp != K:
        xp = jnp.pad(xp, ((0, Mp - M), (0, Kp - K)))
    if Np // tn > 2:
        xp = xp.astype(jnp.bfloat16)

    grid = (Mp // tm, Np // tn, Kp // tk)
    x_bytes = Mp * Kp * xp.dtype.itemsize * (Np // tn)   # x streamed per j-tile
    w_bytes = Kp * Np * 2 * (Mp // tm)                   # W streamed per i-tile
    out_bytes = Mp * Np * 4

    out = pl.pallas_call(
        _linear_gelu_kernel,
        out_shape=jax.ShapeDtypeStruct((Mp, Np), jnp.float32),
        grid_spec=pltpu.PrefetchScalarGridSpec(
            num_scalar_prefetch=0,
            grid=grid,
            in_specs=[
                pl.BlockSpec((tm, tk), lambda i, j, k: (i, k)),   # x tile
                # On v5e, if the W stream ever shows exposed DMA, add
                # pipeline_mode=pl.Buffered(3) here.
                pl.BlockSpec((tk, tn), lambda i, j, k: (k, j)),   # W tile
                pl.BlockSpec((1, tn), lambda i, j, k: (0, j)),    # bias
            ],
            out_specs=pl.BlockSpec((tm, tn), lambda i, j, k: (i, j)),
        ),
        compiler_params=pltpu.CompilerParams(
            dimension_semantics=("parallel", "parallel", "arbitrary"),
            vmem_limit_bytes=_VMEM_LIMIT,
        ),
        cost_estimate=pl.CostEstimate(
            flops=2 * Mp * Np * Kp,
            transcendentals=Mp * Np,
            bytes_accessed=x_bytes + w_bytes + Np * 4 + out_bytes,
        ),
    )(xp, w_pad, b_pad)
    return out[:M, :n_out]


# ----------------------------------------------------------------------------
# LambdaWrapper equivalent (glue, plain JAX / Python)
# ----------------------------------------------------------------------------
class PallasLinearLayer:
    """Stand-in for a layer produced by build_layer(cfg): a Linear layer whose
    hot path (matmul+bias, activation fused by the wrapper's func) runs through
    the Pallas kernel.  The weight is pre-padded to lane multiples and
    pre-cast to bf16 once here so no per-call pad/cast HBM pass is paid."""

    def __init__(self, in_features, out_features, key):
        kw, kb = jax.random.split(key)
        bound = 1.0 / jnp.sqrt(jnp.float32(in_features))
        self.in_features = in_features
        self.out_features = out_features
        # Stored as (in_features, out_features) == W_pt.T, so x @ W matches
        # torch's x @ W_pt.T.
        self.weight = jax.random.uniform(
            kw, (in_features, out_features), jnp.float32, -bound, bound)
        self.bias = jax.random.uniform(
            kb, (1, out_features), jnp.float32, -bound, bound)
        kp = _round_up(in_features, 128)
        npad = _round_up(out_features, 128)
        self.weight_padded = jnp.pad(
            self.weight,
            ((0, kp - in_features), (0, npad - out_features))
        ).astype(jnp.bfloat16)
        self.bias_padded = jnp.pad(
            self.bias, ((0, 0), (0, npad - out_features))).astype(jnp.float32)


class LambdaWrapper:
    """JAX analogue of colossalai LambdaWrapper: holds built layers and a user
    function; forward(*args) -> func(self, *args)."""

    def __init__(self, func, layers_cfg=None):
        self.func = func
        self.layers = self._build_layers(layers_cfg)

    def _build_layers(self, layers_cfg):
        if layers_cfg is None:
            return None
        layers = []
        for cfg in layers_cfg:
            layers.append(
                PallasLinearLayer(cfg["in_features"], cfg["out_features"],
                                  cfg["key"]))
        return layers

    def forward(self, *args, **kwargs):
        return self.func(self, *args, **kwargs)

    __call__ = forward


# The "user customed function": Linear from layers_cfg + GELU, with the
# matmul/bias/GELU hot path inside the Pallas kernel.
def user_func(module, x):
    layer = module.layers[0]
    B, S, H = x.shape
    y2d = _linear_gelu(x.reshape(B * S, H), layer.weight_padded,
                       layer.bias_padded, n_out=layer.out_features)
    return y2d.reshape(B, S, layer.out_features)


# Matching-precision reference (bf16 operands, f32 accumulation, tanh GELU).
def _ref_forward(x2d, w, b):
    xb = x2d.astype(jnp.bfloat16).astype(jnp.float32)
    wb = w.astype(jnp.bfloat16).astype(jnp.float32)
    return jax.nn.gelu(xb @ wb + b, approximate=True)


# ----------------------------------------------------------------------------
# Demo / self-check
# ----------------------------------------------------------------------------
if __name__ == "__main__":
    key = jax.random.PRNGKey(0)
    k_x, k_layer, k_x2, k_layer2, k_x3, k_layer3 = jax.random.split(key, 6)

    # --- small demo shape (single grid point; K/N padded to lane-dense 128) --
    batch, seq, hidden_in, hidden_out = 2, 8, 32, 32
    x = jax.random.normal(k_x, (batch, seq, hidden_in), jnp.float32)
    layers_cfg = [dict(in_features=hidden_in, out_features=hidden_out,
                       key=k_layer)]
    wrapper = LambdaWrapper(user_func, layers_cfg)

    out = jax.block_until_ready(wrapper(x))
    w, b = wrapper.layers[0].weight, wrapper.layers[0].bias
    ref = _ref_forward(x.reshape(-1, hidden_in), w, b).reshape(
        batch, seq, hidden_out)
    assert out.shape == (batch, seq, hidden_out)
    assert jnp.allclose(out, ref, atol=1e-4, rtol=1e-4)
    # Loose sanity check vs the exact-erf, full-f32 path (bf16 + tanh GELU
    # introduce ~1e-2 level differences).
    ref_exact = jax.nn.gelu(x.reshape(-1, hidden_in) @ w + b,
                            approximate=False).reshape(batch, seq, hidden_out)
    assert jnp.allclose(out, ref_exact, atol=5e-2, rtol=5e-2)

    # --- non-power-of-two shape: M padded 300->304 only, K stays one 640 tile
    B2, S2, H_in2, H_out2 = 2, 150, 640, 384
    x2 = jax.random.normal(k_x2, (B2, S2, H_in2), jnp.float32)
    wrapper2 = LambdaWrapper(user_func, [dict(in_features=H_in2,
                                              out_features=H_out2,
                                              key=k_layer2)])
    out2 = jax.block_until_ready(wrapper2(x2))
    w2, b2 = wrapper2.layers[0].weight, wrapper2.layers[0].bias
    ref2 = _ref_forward(x2.reshape(-1, H_in2), w2, b2).reshape(B2, S2, H_out2)
    assert out2.shape == (B2, S2, H_out2)
    assert jnp.allclose(out2, ref2, atol=1e-3, rtol=1e-3)

    # --- multi-tile grid exercising the K-reduction + resident output block --
    B3, S3, H_in3, H_out3 = 4, 256, 1152, 2048   # grid (2, 2, 3)
    x3 = jax.random.normal(k_x3, (B3, S3, H_in3), jnp.float32)
    wrapper3 = LambdaWrapper(user_func, [dict(in_features=H_in3,
                                              out_features=H_out3,
                                              key=k_layer3)])
    out3 = jax.block_until_ready(wrapper3(x3))
    w3, b3 = wrapper3.layers[0].weight, wrapper3.layers[0].bias
    ref3 = _ref_forward(x3.reshape(-1, H_in3), w3, b3).reshape(B3, S3, H_out3)
    assert out3.shape == (B3, S3, H_out3)
    assert jnp.allclose(out3, ref3, atol=1e-3, rtol=1e-3)

    print("KERNEL_OK")
</pallas_src>

<mosaic_0001>
module attributes {stable_mosaic.version = 11 : i64} {
  func.func @_linear_gelu_kernel(%arg0: i32, %arg1: i32, %arg2: i32, %arg3: memref<16x128xf32, #tpu.memory_space<vmem>>, %arg4: memref<128x128xbf16, #tpu.memory_space<vmem>>, %arg5: memref<1x128xf32, #tpu.memory_space<vmem>>, %arg6: memref<16x128xf32, #tpu.memory_space<vmem>>) attributes {dimension_semantics = [#tpu.dimension_semantics<parallel>, #tpu.dimension_semantics<parallel>, #tpu.dimension_semantics<arbitrary>], iteration_bounds = array<i64: 1, 1, 1>, scalar_prefetch = 0 : i64, scratch_operands = 0 : i64, tpu.core_type = #tpu.core_type<tc>, window_params = [{transform_indices = @transform_0, window_bounds = array<i64: 16, 128>}, {transform_indices = @transform_1, window_bounds = array<i64: 128, 128>}, {transform_indices = @transform_2, window_bounds = array<i64: 1, 128>}, {transform_indices = @transform_3, window_bounds = array<i64: 16, 128>}]} {
    %c0_i32 = arith.constant 0 : i32
    %0 = arith.cmpi eq, %arg2, %c0_i32 : i32
    %1 = arith.extui %0 : i1 to i32
    %c0_i32_0 = arith.constant 0 : i32
    %2 = arith.cmpi ne, %1, %c0_i32_0 : i32
    scf.if %2 {
      %c0_10 = arith.constant 0 : index
      %c0_11 = arith.constant 0 : index
      %13 = vector.load %arg5[%c0_10, %c0_11] : memref<1x128xf32, #tpu.memory_space<vmem>>, vector<1x128xf32>
      %14 = vector.shape_cast %13 : vector<1x128xf32> to vector<1x128xf32>
      %15 = vector.broadcast %14 : vector<1x128xf32> to vector<16x128xf32>
      %c0_12 = arith.constant 0 : index
      %c0_13 = arith.constant 0 : index
      %16 = vector.load %arg6[%c0_12, %c0_13] : memref<16x128xf32, #tpu.memory_space<vmem>>, vector<16x128xf32>
      tpu.vector_store %arg6[%c0_12, %c0_13], %15 {strides = array<i32>} : memref<16x128xf32, #tpu.memory_space<vmem>>, vector<16x128xf32>,
    } else {
    }
    %c0 = arith.constant 0 : index
    %c0_1 = arith.constant 0 : index
    %3 = vector.load %arg6[%c0, %c0_1] : memref<16x128xf32, #tpu.memory_space<vmem>>, vector<16x128xf32>
    %c0_2 = arith.constant 0 : index
    %c0_3 = arith.constant 0 : index
    %4 = vector.load %arg3[%c0_2, %c0_3] : memref<16x128xf32, #tpu.memory_space<vmem>>, vector<16x128xf32>
    %5 = arith.truncf %4 : vector<16x128xf32> to vector<16x128xbf16>
    %c0_4 = arith.constant 0 : index
    %c0_5 = arith.constant 0 : index
    %6 = vector.load %arg4[%c0_4, %c0_5] : memref<128x128xbf16, #tpu.memory_space<vmem>>, vector<128x128xbf16>
    %cst = arith.constant dense<0.000000e+00> : vector<16x128xf32>
    %7 = tpu.matmul %5, %6, %cst {dimension_numbers = #tpu.dot_dimension_numbers<[1], [0], [0], [1], [0, 0, 1, 1], [], []>} : vector<16x128xbf16>, vector<128x128xbf16>, vector<16x128xf32> -> vector<16x128xf32>
    %8 = arith.addf %3, %7 : vector<16x128xf32>
    %c0_6 = arith.constant 0 : index
    %c0_7 = arith.constant 0 : index
    %9 = vector.load %arg6[%c0_6, %c0_7] : memref<16x128xf32, #tpu.memory_space<vmem>>, vector<16x128xf32>
    tpu.vector_store %arg6[%c0_6, %c0_7], %8 {strides = array<i32>} : memref<16x128xf32, #tpu.memory_space<vmem>>, vector<16x128xf32>,
    %c0_i32_8 = arith.constant 0 : i32
    %10 = arith.cmpi eq, %arg2, %c0_i32_8 : i32
    %11 = arith.extui %10 : i1 to i32
    %c0_i32_9 = arith.constant 0 : i32
    %12 = arith.cmpi ne, %11, %c0_i32_9 : i32
    scf.if %12 {
      %c0_10 = arith.constant 0 : index
      %c0_11 = arith.constant 0 : index
      %13 = vector.load %arg6[%c0_10, %c0_11] : memref<16x128xf32, #tpu.memory_space<vmem>>, vector<16x128xf32>
      %14 = arith.mulf %13, %13 : vector<16x128xf32>
      %15 = arith.mulf %13, %14 : vector<16x128xf32>
      %cst_12 = arith.constant 4.471500e-02 : f32
      %16 = vector.broadcast %cst_12 : f32 to vector<16x128xf32>
      %17 = arith.mulf %16, %15 : vector<16x128xf32>
      %18 = arith.addf %13, %17 : vector<16x128xf32>
      %cst_13 = arith.constant 0.797884583 : f32
      %19 = vector.broadcast %cst_13 : f32 to vector<16x128xf32>
      %20 = arith.mulf %19, %18 : vector<16x128xf32>
      %21 = math.tanh %20 : vector<16x128xf32>
      %cst_14 = arith.constant 1.000000e+00 : f32
      %22 = vector.broadcast %cst_14 : f32 to vector<16x128xf32>
      %23 = arith.addf %22, %21 : vector<16x128xf32>
      %cst_15 = arith.constant 5.000000e-01 : f32
      %24 = vector.broadcast %cst_15 : f32 to vector<16x128xf32>
      %25 = arith.mulf %24, %23 : vector<16x128xf32>
      %26 = arith.mulf %13, %25 : vector<16x128xf32>
      %c0_16 = arith.constant 0 : index
      %c0_17 = arith.constant 0 : index
      %27 = vector.load %arg6[%c0_16, %c0_17] : memref<16x128xf32, #tpu.memory_space<vmem>>, vector<16x128xf32>
      tpu.vector_store %arg6[%c0_16, %c0_17], %26 {strides = array<i32>} : memref<16x128xf32, #tpu.memory_space<vmem>>, vector<16x128xf32>,
    } else {
    }
    return
  }
  func.func @transform_0(%arg0: i32, %arg1: i32, %arg2: i32) -> (i32, i32) {
    %c0_i32 = arith.constant 0 : i32
    return %arg0, %arg2 : i32, i32
  }
  func.func @transform_1(%arg0: i32, %arg1: i32, %arg2: i32) -> (i32, i32) {
    %c0_i32 = arith.constant 0 : i32
    return %arg2, %arg1 : i32, i32
  }
  func.func @transform_2(%arg0: i32, %arg1: i32, %arg2: i32) -> (i32, i32) {
    %c0_i32 = arith.constant 0 : i32
    %c0_i32_0 = arith.constant 0 : i32
    return %c0_i32, %arg1 : i32, i32
  }
  func.func @transform_3(%arg0: i32, %arg1: i32, %arg2: i32) -> (i32, i32) {
    %c0_i32 = arith.constant 0 : i32
    return %arg0, %arg1 : i32, i32
  }
}

</mosaic_0001>

<llo_original>
// kernel: _linear_gelu.1
$region0: #{_linear_gelu.1}
  #allocation0 [shape = 'u32[]', space=smem, size = 0x4, offset = 0x4, fixed_abs, tag = 'smem constant byte address 0x4 - core index']
  #allocation1 [shape = 'u32[144,128]{1,0:T(1,128)}', space=vmem, size = 0x12000, scoped, tag = 'internal scratch']
  %s0 = inlined_call_operand.vmem [shape: f32[16,128], index: 0, kind: input, shape index: {}]
  %s1 = inlined_call_operand.hbm [shape: bf16[128,128], index: 1, kind: input, shape index: {}]
  %s2 = inlined_call_operand.vmem [shape: f32[1,128], index: 2, kind: input, shape index: {}]
  %s3 = inlined_call_operand.hbm [shape: f32[16,128], index: 3, kind: output, shape index: {}]
  %s4 = sld [smem:[#allocation0]]
  $region34: #{_linear_gelu.1} parent=0
    _
  %s6 = ssub.s32 1, %s4
  %s7 = scalar_select 0, %s6, %s4
  $region1: #{_linear_gelu.1} parent=0
    #allocation2 [shape = 'u8[32768]{0}', space=vmem, size = 0x8000, scoped, tag = 'input window, operand 1, single buffered']
    #allocation3 [shape = 's32[1]{0}', space=sflag, size = 0x4, scoped, tag = 'scoped memory for _linear_gelu.1']
    #allocation4 [shape = 's32[1]{0}', space=sflag, size = 0x4, scoped, tag = 'scoped memory for _linear_gelu.1']
    #allocation5 [shape = 'u8[8192]{0}', space=vmem, size = 0x2000, scoped, tag = 'output window, operand 0, single buffered']
    %8 = vsyncpa [#allocation3], 0
    %9 = vsyncpa [#allocation4], 0
    // Predicated region
    $region2: #{_linear_gelu.1} parent=1 // pred_check
      _
    $region3: #{_linear_gelu.1} parent=1 // pred_check_branch
      %11 = sbr.rel (0) target = $region5
    $region4: #{_linear_gelu.1} parent=1 // pred_region
      _
    $region5: #{_linear_gelu.1} parent=1 // pred_fallthru
      _
    // Predicated region
    $region6: #{_linear_gelu.1} parent=1 // pred_check
      _
    $region7: #{_linear_gelu.1} parent=1 // pred_check_branch
      %13 = sbr.rel (0) target = $region9
    $region8: #{_linear_gelu.1} parent=1 // pred_region
      %s15 = ssub.s32 1024, 1024
      %16 = vsyncadd [#allocation3], %s15
      %s17 = sshll.u32 [#allocation2], 4
      %s18 = int_to_ptr.vmem [resolvable:$true] %s17
      %23 = dma.hbm_to_vmem [thread:$0]  %s1, 1024, %s18, [#allocation3], 64, 64, 4
    $region9: #{_linear_gelu.1} parent=1 // pred_fallthru
      _
    // Predicated region
    $region10: #{_linear_gelu.1} parent=1 // pred_check
      _
    $region11: #{_linear_gelu.1} parent=1 // pred_check_branch
      %25 = sbr.rel (0) target = $region13
    $region12: #{_linear_gelu.1} parent=1 // pred_region
      _
    $region13: #{_linear_gelu.1} parent=1 // pred_fallthru
      _
    // Predicated region
    $region14: #{_linear_gelu.1} parent=1 // pred_check
      _
    $region15: #{_linear_gelu.1} parent=1 // pred_check_branch
      %27 = sbr.rel (0) target = $region17
    $region16: #{_linear_gelu.1} parent=1 // pred_region
      %28 = dma.done [#allocation3], 1024
    $region17: #{_linear_gelu.1} parent=1 // pred_fallthru
      _
    %p30 = scmp.eq.s32.totalorder 0, 0
    // Predicated region
    $region18: #{_linear_gelu.1} parent=1 // pred_check
      %p31 = pneg %p30
    $region19: #{_linear_gelu.1} parent=1 // pred_check_branch
      %33 = sbr.rel (%p31) target = $region21
    $region20: #{_linear_gelu.1} parent=1 // pred_region
      %v34 = vld [vmem:[%s2] sm:$0x1]
      %v36 = vlaneseq
      %v37 = vshrl.u32 %v36, 7
      %v38 = vsub.s32 0, %v37
      %v39 = vrot.slane %v34, %v38
      %41 = vst [vmem:[#allocation5] sm:$0xff] %v39
      %42 = vst [vmem:[#allocation5 + $0x8] sm:$0xff] %v39
    $region21: #{_linear_gelu.1} parent=1 // pred_fallthru
      _
    %v43 = vld [vmem:[#allocation5] sm:$0xff]
    %v44 = vld [vmem:[#allocation5 + $0x8] sm:$0xff]
    %v45 = vld [vmem:[%s0] sm:$0xff]
    %v46 = vld [vmem:[%s0 + $0x8] sm:$0xff]
    %v47 = vpack.c.bf16 %v46, %v45
    %v48 = vld [vmem:[#allocation2] sm:$0xf]
    %v49 = vld [vmem:[#allocation2 + $0x4] sm:$0xf]
    %v50 = vld [vmem:[#allocation2 + $0x8] sm:$0xf]
    %v51 = vld [vmem:[#allocation2 + $0xc] sm:$0xf]
    %v52 = vld [vmem:[#allocation2 + $0x10] sm:$0xf]
    %v53 = vld [vmem:[#allocation2 + $0x14] sm:$0xf]
    %v54 = vld [vmem:[#allocation2 + $0x18] sm:$0xf]
    %v55 = vld [vmem:[#allocation2 + $0x1c] sm:$0xf]
    %v56 = vld [vmem:[#allocation2 + $0x20] sm:$0xf]
    %v57 = vld [vmem:[#allocation2 + $0x24] sm:$0xf]
    %v58 = vld [vmem:[#allocation2 + $0x28] sm:$0xf]
    %v59 = vld [vmem:[#allocation2 + $0x2c] sm:$0xf]
    %v60 = vld [vmem:[#allocation2 + $0x30] sm:$0xf]
    %v61 = vld [vmem:[#allocation2 + $0x34] sm:$0xf]
    %v62 = vld [vmem:[#allocation2 + $0x38] sm:$0xf]
    %v63 = vld [vmem:[#allocation2 + $0x3c] sm:$0xf]
    %v80 = vunpack.c.l.b16 %v48
    %v81 = vunpack.c.l.b16 %v49
    %v82 = vunpack.c.l.b16 %v50
    %v83 = vunpack.c.l.b16 %v51
    %v84 = vunpack.c.l.b16 %v52
    %v85 = vunpack.c.l.b16 %v53
    %v86 = vunpack.c.l.b16 %v54
    %v87 = vunpack.c.l.b16 %v55
    %v88 = vunpack.c.l.b16 %v56
    %v89 = vunpack.c.l.b16 %v57
    %v90 = vunpack.c.l.b16 %v58
    %v91 = vunpack.c.l.b16 %v59
    %v92 = vunpack.c.l.b16 %v60
    %v93 = vunpack.c.l.b16 %v61
    %v94 = vunpack.c.l.b16 %v62
    %v95 = vunpack.c.l.b16 %v63
    %v96 = vpack.c.b16 %v81, %v80
    %v97 = vpack.c.b16 %v83, %v82
    %v98 = vpack.c.b16 %v85, %v84
    %v99 = vpack.c.b16 %v87, %v86
    %v100 = vpack.c.b16 %v89, %v88
    %v101 = vpack.c.b16 %v91, %v90
    %v102 = vpack.c.b16 %v93, %v92
    %v103 = vpack.c.b16 %v95, %v94
    %112 = vmatprep.subr.bf16.mxu0 0
    %113 = vmatpush1.bf16.msra.mxu0 %v96
    %114 = vmatprep.subr.bf16.mxu0 0
    %115 = vmatpush1.bf16.msra.mxu0 %v97
    %116 = vmatprep.subr.bf16.mxu0 0
    %117 = vmatpush1.bf16.msra.mxu0 %v98
    %118 = vmatprep.subr.bf16.mxu0 0
    %119 = vmatpush1.bf16.msra.mxu0 %v99
    %120 = vmatprep.subr.bf16.mxu0 0
    %121 = vmatpush1.bf16.msra.mxu0 %v100
    %122 = vmatprep.subr.bf16.mxu0 0
    %123 = vmatpush1.bf16.msra.mxu0 %v101
    %124 = vmatprep.subr.bf16.mxu0 0
    %125 = vmatpush1.bf16.msra.mxu0 %v102
    %126 = vmatprep.subr.bf16.mxu0 0
    %127 = vmatpush1.bf16.msra.mxu0 %v103
    %128 = vmatprep.subr.bf16.mxu0 0
    %129 = vmatpush1.bf16.msra.mxu0 0
    %130 = vmatprep.subr.bf16.mxu0 0
    %131 = vmatpush1.bf16.msra.mxu0 0
    %132 = vmatprep.subr.bf16.mxu0 0
    %133 = vmatpush1.bf16.msra.mxu0 0
    %134 = vmatprep.subr.bf16.mxu0 0
    %135 = vmatpush1.bf16.msra.mxu0 0
    %136 = vmatprep.subr.bf16.mxu0 0
    %137 = vmatpush1.bf16.msra.mxu0 0
    %138 = vmatprep.subr.bf16.mxu0 0
    %139 = vmatpush1.bf16.msra.mxu0 0
    %140 = vmatprep.subr.bf16.mxu0 0
    %141 = vmatpush1.bf16.msra.mxu0 0
    %142 = vmatprep.subr.bf16.mxu0 0
    %143 = vmatpush1.bf16.msra.mxu0 0
    %144 = vmatprep.mubr.bf16.mxu0 0
    %145 = vmatmul.mubr.bf16.gmra.mrb[0].mxu0 %v47
    %v146 = vpop.f32.mrb[0].mxu0
    %v147 = vadd.f32 0.0, %v146
    %v148 = vpop.f32.mrb[0].mxu0
    %v149 = vpop.f32.mrb[0].mxu0
    %v150 = vadd.f32 0.0, %v149
    %v151 = vpop.f32.mrb[0].mxu0
    %152 = vdwg.mxu0
    %v153 = vadd.f32 %v43, %v147
    %v154 = vadd.f32 %v44, %v150
    %155 = vst [vmem:[#allocation5] sm:$0xff] %v153
    %156 = vst [vmem:[#allocation5 + $0x8] sm:$0xff] %v154
    // Predicated region
    $region22: #{_linear_gelu.1} parent=1 // pred_check
      %p157 = pneg %p30
    $region23: #{_linear_gelu.1} parent=1 // pred_check_branch
      %159 = sbr.rel (%p157) target = $region25
    $region24: #{_linear_gelu.1} parent=1 // pred_region
      %v160 = vld [vmem:[#allocation5] sm:$0xff]
      %v161 = vld [vmem:[#allocation5 + $0x8] sm:$0xff]
      %v162 = vmul.f32 %v160, %v160
      %v163 = vmul.f32 %v161, %v161
      %v164 = vmul.f32 %v160, %v162
      %v165 = vmul.f32 %v161, %v163
      %v166 = vmul.f32 %v164, 0.044715
      %v167 = vmul.f32 %v165, 0.044715
      %v168 = vadd.f32 %v160, %v166
      %v169 = vadd.f32 %v161, %v167
      %v170 = vmul.f32 %v168, 0.7978846
      %v171 = vmul.f32 %v169, 0.7978846
      %v172 = vtanh.pop %v170
      %v173 = vtanh.pop %v171
      %v174 = vadd.f32 %v172, 1.0
      %v175 = vadd.f32 %v173, 1.0
      %v176 = vmul.f32 %v174, 0.5
      %v177 = vmul.f32 %v175, 0.5
      %v178 = vmul.f32 %v160, %v176
      %v179 = vmul.f32 %v161, %v177
      %180 = vst [vmem:[#allocation5] sm:$0xff] %v178
      %181 = vst [vmem:[#allocation5 + $0x8] sm:$0xff] %v179
    $region25: #{_linear_gelu.1} parent=1 // pred_fallthru
      _
    // Predicated region
    $region26: #{_linear_gelu.1} parent=1 // pred_check
      _
    $region27: #{_linear_gelu.1} parent=1 // pred_check_branch
      %183 = sbr.rel (0) target = $region29
    $region28: #{_linear_gelu.1} parent=1 // pred_region
      %s185 = ssub.s32 256, 256
      %186 = vsyncadd [#allocation4], %s185
      %s187 = sshll.u32 [#allocation5], 4
      %s188 = int_to_ptr.vmem [resolvable:$true] %s187
      %193 = dma.vmem_to_hbm [thread:$0]  %s188, 256, %s3, [#allocation4], 128, 128, 8
    $region29: #{_linear_gelu.1} parent=1 // pred_fallthru
      _
    // Predicated region
    $region30: #{_linear_gelu.1} parent=1 // pred_check
      _
    $region31: #{_linear_gelu.1} parent=1 // pred_check_branch
      %195 = sbr.rel (0) target = $region33
    $region32: #{_linear_gelu.1} parent=1 // pred_region
      %196 = dma.done [#allocation4], 256
    $region33: #{_linear_gelu.1} parent=1 // pred_fallthru
      _
    %197 = vsyncpa [#allocation3], 1
    %198 = vsyncpa [#allocation4], 1

</llo_original>
